<compile_context>
chip_gen: v7x
topology: tpu7x:2x2x1
jax: 0.10.0
libtpu: 0.0.40
codegen_flags: <defaults>
</compile_context>

<pallas_src>
import math

import jax
import jax.numpy as jnp
from jax.experimental import pallas as pl
from jax.experimental.pallas import tpu as pltpu


def _softplus_eps_kernel(b_ref, o_ref, *, eps):
    # Compute in f32 regardless of parameter dtype; cast on store (v5e-safe).
    b = b_ref[...].astype(jnp.float32)
    # Numerically stable softplus: max(b, 0) + log1p(exp(-|b|)).
    sp = jnp.maximum(b, 0.0) + jnp.log1p(jnp.exp(-jnp.abs(b)))
    o_ref[...] = (sp + eps).astype(o_ref.dtype)


# Single-block path limit: 1M elements (~8 MiB of f32 in+out slabs) leaves
# generous headroom under v7x's 32 MiB scoped VMEM default.
_SINGLE_BLOCK_ELEM_LIMIT = 1 << 20
# Lane/sublane-dense tile for the (rare) large-C path.
_TILE_ROWS, _TILE_COLS = 8, 4096


def variance_encoder_forward(b, eps=1e-5):
    """Pallas implementation of VarianceEncoder.forward: softplus(b) + eps.

    The module's `x` argument is never read by the math, so it is intentionally
    not part of this signature (avoids a pointless device transfer in eager).
    Returns an array with b's shape and dtype.
    """
    orig_shape = b.shape
    c = b.size
    out_dtype = b.dtype
    itemsize = jnp.dtype(out_dtype).itemsize

    # Tiny, accurate cost hint so XLA can schedule/overlap around the call.
    cost = pl.CostEstimate(
        flops=3 * c, transcendentals=2 * c, bytes_accessed=2 * c * itemsize
    )

    flat = b.reshape(-1)

    if c <= _SINGLE_BLOCK_ELEM_LIMIT:
        # --- common case: single full-block, no grid, no pipelining ---------
        c_pad = ((c + 127) // 128) * 128  # lane-dense last dim
        if c_pad % 1024 == 0:
            slab = (8, c_pad // 8)        # sublane- and lane-dense
        else:
            slab = (c_pad // 128, 128)    # lane-dense
        if c_pad != c:
            flat = jnp.pad(flat, (0, c_pad - c))
        b2d = flat.reshape(slab)

        out2d = pl.pallas_call(
            lambda b_ref, o_ref: _softplus_eps_kernel(b_ref, o_ref, eps=eps),
            out_shape=jax.ShapeDtypeStruct(slab, out_dtype),
            in_specs=[pl.BlockSpec(memory_space=pltpu.MemorySpace.VMEM)],
            out_specs=pl.BlockSpec(memory_space=pltpu.MemorySpace.VMEM),
            cost_estimate=cost,
        )(b2d)
        out_flat = out2d.reshape(-1)[:c]
    else:
        # --- pathological C: tile so no block approaches v7x's VMEM limit ---
        blk = _TILE_ROWS * _TILE_COLS
        c_pad = ((c + blk - 1) // blk) * blk
        if c_pad != c:
            flat = jnp.pad(flat, (0, c_pad - c))
        rows = c_pad // _TILE_COLS
        b2d = flat.reshape(rows, _TILE_COLS)

        out2d = pl.pallas_call(
            lambda b_ref, o_ref: _softplus_eps_kernel(b_ref, o_ref, eps=eps),
            out_shape=jax.ShapeDtypeStruct((rows, _TILE_COLS), out_dtype),
            grid=(rows // _TILE_ROWS,),
            in_specs=[pl.BlockSpec((_TILE_ROWS, _TILE_COLS), lambda i: (i, 0))],
            out_specs=pl.BlockSpec((_TILE_ROWS, _TILE_COLS), lambda i: (i, 0)),
            cost_estimate=cost,
            compiler_params=pltpu.CompilerParams(
                dimension_semantics=("parallel",)),
        )(b2d)
        out_flat = out2d.reshape(-1)[:c]

    return out_flat.reshape(orig_shape)


def make_variance_encoder_params(shape, init=0.1, channelwise=True, eps=1e-5,
                                 dtype=jnp.float32):
    """Deterministic parameter init matching the PyTorch __init__."""
    if init <= eps:
        raise ValueError(f"init ({init}) must be > eps ({eps}) for "
                         "log(exp(init - eps) - 1) to be defined.")
    # init = log(exp(init - eps) - 1)  so that softplus(b) + eps == init.
    # Host double precision; no jnp float64 needed.
    init_val = math.log(math.exp(init - eps) - 1.0)
    if channelwise:
        if len(shape) == 4:
            b_shape = (1, shape[1], 1, 1)
        elif len(shape) == 3:
            b_shape = (1, 1, shape[2])
        elif len(shape) == 2:
            b_shape = (1, shape[1])
        else:
            raise ValueError()
    else:
        b_shape = shape
    return jnp.full(b_shape, init_val, dtype=dtype)


if __name__ == "__main__":
    # Small NCHW input consistent with the module: batch=2, channels=4, spatial=16.
    key = jax.random.PRNGKey(0)
    B, C, H, W = 2, 4, 16, 16
    x = jax.random.normal(key, (B, C, H, W), dtype=jnp.float32)  # unused by forward

    eps = 1e-5
    b = make_variance_encoder_params(x.shape, init=0.1, channelwise=True, eps=eps)

    out = variance_encoder_forward(b, eps=eps)
    out = jax.block_until_ready(out)

    # Reference check in plain JAX: softplus(b) + eps.
    ref = jnp.logaddexp(b, 0.0) + eps
    assert out.shape == (1, C, 1, 1), out.shape
    assert out.dtype == b.dtype, out.dtype
    assert jnp.allclose(out, ref, atol=1e-6), (out, ref)
    # softplus(log(exp(init - eps) - 1)) + eps == init == 0.1
    assert jnp.allclose(out, 0.1, atol=1e-6)

    print("KERNEL_OK")
</pallas_src>

<mosaic_0001>
module attributes {stable_mosaic.version = 11 : i64} {
  func.func @_lambda_(%arg0: memref<1x128xf32, #tpu.memory_space<vmem>>, %arg1: memref<1x128xf32, #tpu.memory_space<vmem>>) attributes {dimension_semantics = [], scalar_prefetch = 0 : i64, scratch_operands = 0 : i64, tpu.core_type = #tpu.core_type<tc>} {
    %c0 = arith.constant 0 : index
    %c0_0 = arith.constant 0 : index
    %0 = vector.load %arg0[%c0, %c0_0] : memref<1x128xf32, #tpu.memory_space<vmem>>, vector<1x128xf32>
    %cst = arith.constant 0.000000e+00 : f32
    %1 = vector.broadcast %cst : f32 to vector<1x128xf32>
    %2 = arith.maximumf %0, %1 : vector<1x128xf32>
    %3 = math.absf %0 : vector<1x128xf32>
    %cst_1 = arith.constant 0.000000e+00 : f32
    %4 = vector.broadcast %cst_1 : f32 to vector<1x128xf32>
    %5 = arith.subf %4, %3 : vector<1x128xf32>
    %6 = math.exp %5 : vector<1x128xf32>
    %7 = math.log1p %6 : vector<1x128xf32>
    %8 = arith.addf %2, %7 : vector<1x128xf32>
    %cst_2 = arith.constant 9.99999974E-6 : f32
    %9 = vector.broadcast %cst_2 : f32 to vector<1x128xf32>
    %10 = arith.addf %8, %9 : vector<1x128xf32>
    %c0_3 = arith.constant 0 : index
    %c0_4 = arith.constant 0 : index
    %11 = vector.load %arg1[%c0_3, %c0_4] : memref<1x128xf32, #tpu.memory_space<vmem>>, vector<1x128xf32>
    tpu.vector_store %arg1[%c0_3, %c0_4], %10 {strides = array<i32>} : memref<1x128xf32, #tpu.memory_space<vmem>>, vector<1x128xf32>,
    return
  }
}

</mosaic_0001>

<llo_original>
// kernel: tpu_custom_call.1
$region0: #{tpu_custom_call.1}
  #allocation0 [shape = 'u32[]', space=smem, size = 0x4, offset = 0x4, fixed_abs, tag = 'smem constant byte address 0x4 - core index']
  #allocation1 [shape = 'u32[144,128]{1,0:T(1,128)}', space=vmem, size = 0x12000, scoped, tag = 'internal scratch']
  %s0 = inlined_call_operand.hbm [shape: f32[1,128], index: 0, kind: input, shape index: {}]
  %s1 = inlined_call_operand.hbm [shape: f32[1,128], index: 1, kind: output, shape index: {}]
  %s2 = sld [smem:[#allocation0]]
  $region18: #{tpu_custom_call.1} parent=0
    _
  %s4 = ssub.s32 1, %s2
  %s5 = scalar_select 0, %s4, %s2
  $region1: #{tpu_custom_call.1} parent=0
    #allocation2 [shape = 'u8[512]{0}', space=vmem, size = 0x400, scoped, tag = 'input window, operand 0, single buffered']
    #allocation3 [shape = 's32[1]{0}', space=sflag, size = 0x4, scoped, tag = 'scoped memory for tpu_custom_call.1']
    #allocation4 [shape = 's32[1]{0}', space=sflag, size = 0x4, scoped, tag = 'scoped memory for tpu_custom_call.1']
    #allocation5 [shape = 'u8[512]{0}', space=vmem, size = 0x400, scoped, tag = 'output window, operand 0, single buffered']
    %6 = vsyncpa [#allocation3], 0
    %7 = vsyncpa [#allocation4], 0
    // Predicated region
    $region2: #{tpu_custom_call.1} parent=1 // pred_check
      _
    $region3: #{tpu_custom_call.1} parent=1 // pred_check_branch
      %9 = sbr.rel (0) target = $region5
    $region4: #{tpu_custom_call.1} parent=1 // pred_region
      %s11 = ssub.s32 16, 16
      %12 = vsyncadd [#allocation3], %s11
      %s14 = sshll.u32 [#allocation2], 4
      %s15 = int_to_ptr.vmem [resolvable:$true] %s14
      %17 = dma.hbm_to_vmem [thread:$0]  %s0, 16, %s15, [#allocation3]
    $region5: #{tpu_custom_call.1} parent=1 // pred_fallthru
      _
    // Predicated region
    $region6: #{tpu_custom_call.1} parent=1 // pred_check
      _
    $region7: #{tpu_custom_call.1} parent=1 // pred_check_branch
      %19 = sbr.rel (0) target = $region9
    $region8: #{tpu_custom_call.1} parent=1 // pred_region
      %20 = dma.done [#allocation3], 16
    $region9: #{tpu_custom_call.1} parent=1 // pred_fallthru
      _
    %v21 = vld [vmem:[#allocation2] sm:$0x1]
    %v22 = vmax.f32 %v21, 0.0
    %v23 = vand.u32 2147483647, %v21
    %v24 = vsub.f32 0.0, %v23
    %v25 = vmul.f32 %v24, 1.442695
    %v26 = vpow.pop %v25
    %v27 = vadd.f32 %v26, 1.0
    %v28 = vlog2.pop %v27
    %v29 = vmul.f32 %v28, 0.6931472
    %v30 = vmul.f32 -0.5, %v26
    %v31 = vadd.f32 %v30, 1.0
    %v32 = vmul.f32 %v31, %v26
    %v33 = vand.u32 2147483647, %v26
    %vm34 = vcmp.lt.f32.partialorder %v33, 0.0004427343
    %v35 = vsel %vm34, %v32, %v29
    %v36 = vadd.f32 %v22, %v35
    %v37 = vadd.f32 %v36, 1e-05
    %38 = vst [vmem:[#allocation5] sm:$0x1] %v37
    // Predicated region
    $region10: #{tpu_custom_call.1} parent=1 // pred_check
      _
    $region11: #{tpu_custom_call.1} parent=1 // pred_check_branch
      %40 = sbr.rel (0) target = $region13
    $region12: #{tpu_custom_call.1} parent=1 // pred_region
      %s42 = ssub.s32 16, 16
      %43 = vsyncadd [#allocation4], %s42
      %s45 = sshll.u32 [#allocation5], 4
      %s46 = int_to_ptr.vmem [resolvable:$true] %s45
      %48 = dma.vmem_to_hbm [thread:$0]  %s46, 16, %s1, [#allocation4]
    $region13: #{tpu_custom_call.1} parent=1 // pred_fallthru
      _
    // Predicated region
    $region14: #{tpu_custom_call.1} parent=1 // pred_check
      _
    $region15: #{tpu_custom_call.1} parent=1 // pred_check_branch
      %50 = sbr.rel (0) target = $region17
    $region16: #{tpu_custom_call.1} parent=1 // pred_region
      %51 = dma.done [#allocation4], 16
    $region17: #{tpu_custom_call.1} parent=1 // pred_fallthru
      _
    %52 = vsyncpa [#allocation3], 1
    %53 = vsyncpa [#allocation4], 1

</llo_original>
